<compile_context>
chip_gen: v6e
topology: v6e:2x2x1
jax: 0.10.0
libtpu: 0.0.40
codegen_flags: <defaults>
</compile_context>

<pallas_src>
import functools

import jax
import jax.numpy as jnp
from jax.experimental import pallas as pl
from jax.experimental.pallas import tpu as pltpu

EPS = 1e-5
_NSPLIT = 2                       # leading 'parallel' axis: per-core partial stats (v7x megacore)
_VMEM_BUDGET = 40 * 1024 * 1024   # tile-sizing budget, safe on every generation (v7x phys = 64 MiB)
_VMEM_LIMIT = 48 * 1024 * 1024    # explicit scoped-VMEM limit handed to Mosaic


def _round_up(x, m):
    return (x + m - 1) // m * m


def _pick_tile(n, cp, hp, tile_n, mxu_bytes, inter_bytes):
    """Largest batch tile whose double-buffered working set (weights + row
    streams) fits the VMEM budget.  Multiple of 16 for bf16 sublane packing."""
    w_fixed = 2 * cp * hp * mxu_bytes                 # double-buffered weight block
    fixed = w_fixed + 256 * 1024                      # aff/stats blocks + slack
    per_row = 2 * max(cp * mxu_bytes + hp * inter_bytes,        # pass 1
                      (hp + cp) * inter_bytes,                  # pass 2
                      cp * (inter_bytes + mxu_bytes + 4))       # pass 3
    # TODO(synk): K-tile the weights if w_fixed alone exceeds the budget.
    avail = max(_VMEM_BUDGET - fixed, 16 * per_row)
    cap = max(16, avail // per_row // 16 * 16)
    small = max(16, _round_up(-(-n // 2), 16))        # don't over-pad tiny batches
    tile_n = max(16, tile_n // 16 * 16)
    return int(min(tile_n, cap, small))


# --------------------------------------------------------------------------
# In-kernel helpers
# --------------------------------------------------------------------------
def _masked_stats(vals, *, tile_rows, n_valid, row0, via_mxu):
    """(2, F) [sum ; sum_sq] of `vals` over valid (non-pad) rows."""
    if via_mxu:
        # Wide-K layers: batch reduction as a 1-row matmul on the MXU.
        col = jax.lax.broadcasted_iota(jnp.int32, (1, tile_rows), 1) + row0
        ones = (col < n_valid).astype(jnp.float32)
        s1 = jnp.dot(ones, vals, preferred_element_type=jnp.float32)
        s2 = jnp.dot(ones, vals * vals, preferred_element_type=jnp.float32)
    else:
        # Narrow-K layers: keep the MXU free, reduce on the VPU/XLU.
        row = jax.lax.broadcasted_iota(jnp.int32, (tile_rows, 1), 0) + row0
        mask = (row < n_valid).astype(jnp.float32)
        vm = vals * mask
        s1 = jnp.sum(vm, axis=0, keepdims=True)
        s2 = jnp.sum(vm * vals, axis=0, keepdims=True)
    return jnp.concatenate([s1, s2], axis=0)          # single fused (2, F) update


# --------------------------------------------------------------------------
# Kernels
# --------------------------------------------------------------------------
def _fc1_stats_kernel(x_ref, w1_ref, h_ref, stats_ref, *,
                      n_valid, tile_rows, tiles_per_core, via_mxu):
    """h_pre = x @ W1 ; accumulate per-feature [sum, sum_sq] of h_pre."""
    c = pl.program_id(0)
    i = pl.program_id(1)
    t = c * tiles_per_core + i

    h = jnp.dot(x_ref[...], w1_ref[...], preferred_element_type=jnp.float32)
    hq = h.astype(h_ref.dtype)
    h_ref[...] = hq

    @pl.when(i == 0)
    def _init():
        stats_ref[...] = jnp.zeros_like(stats_ref)

    # Stats from the (possibly bf16-quantized) values actually stored, so the
    # BN apply in pass 2 is internally consistent with these statistics.
    upd = _masked_stats(hq.astype(jnp.float32), tile_rows=tile_rows,
                        n_valid=n_valid, row0=t * tile_rows, via_mxu=via_mxu)
    stats_ref[...] += upd[None, :, :]


def _bn1_fc2_stats_kernel(h_ref, aff1_ref, w2_ref, o_ref, stats_ref, *,
                          n_valid, tile_rows, tiles_per_core, via_mxu, mxu_dtype):
    """h = ReLU(h_pre*scale1 + shift1); o_pre = h @ W2; accumulate o stats."""
    c = pl.program_id(0)
    i = pl.program_id(1)
    t = c * tiles_per_core + i

    scale = aff1_ref[0:1, :]
    shift = aff1_ref[1:2, :]
    hn = jnp.maximum(h_ref[...].astype(jnp.float32) * scale + shift, 0.0)

    o = jnp.dot(hn.astype(mxu_dtype), w2_ref[...],
                preferred_element_type=jnp.float32)
    oq = o.astype(o_ref.dtype)
    o_ref[...] = oq

    @pl.when(i == 0)
    def _init():
        stats_ref[...] = jnp.zeros_like(stats_ref)

    upd = _masked_stats(oq.astype(jnp.float32), tile_rows=tile_rows,
                        n_valid=n_valid, row0=t * tile_rows, via_mxu=via_mxu)
    stats_ref[...] += upd[None, :, :]


def _bn2_residual_kernel(o_ref, x_ref, aff2_ref, out_ref):
    """out = ReLU(o_pre*scale2 + shift2 + x)."""
    scale = aff2_ref[0:1, :]
    shift = aff2_ref[1:2, :]
    out_ref[...] = jnp.maximum(
        o_ref[...].astype(jnp.float32) * scale + shift
        + x_ref[...].astype(jnp.float32), 0.0).astype(out_ref.dtype)


# --------------------------------------------------------------------------
# Wrapper
# --------------------------------------------------------------------------
def _bn_affine(stats, gamma, beta, n):
    """Fold per-core partial stats + gamma/beta into fused (scale, shift)."""
    s = stats.sum(axis=0)                              # sum the core partials
    mean = s[0] / n
    var = jnp.maximum(s[1] / n - mean * mean, 0.0)
    scale = gamma * jax.lax.rsqrt(var + EPS)
    shift = beta - mean * scale
    return jnp.stack([scale, shift], axis=0)           # (2, F)


def block_forward(x, params, *, tile_n=512,
                  mxu_dtype=jnp.bfloat16, inter_dtype=jnp.bfloat16):
    """x: (N, inplanes) float32.  params: fc/bn parameters (PyTorch layout)."""
    n, c = x.shape
    hdim = params["w1"].shape[0]
    f32 = jnp.float32
    mxu_bytes = jnp.dtype(mxu_dtype).itemsize
    inter_bytes = jnp.dtype(inter_dtype).itemsize

    cp = _round_up(c, 128)
    hp = _round_up(hdim, 128)
    tile = _pick_tile(n, cp, hp, tile_n, mxu_bytes, inter_bytes)
    n_pad = _round_up(n, _NSPLIT * tile)
    tpc = n_pad // (_NSPLIT * tile)                    # batch tiles per core-split
    num_tiles = _NSPLIT * tpc

    # Zero padding keeps the math exact (padded rows/cols of x, W, gamma, beta
    # are zero).  fc biases are dropped: training-mode BN subtracts the batch
    # mean, so b1/b2 cancel exactly.  Casting to the MXU dtype happens here in
    # the wrapper so the kernels DMA half the bytes.
    x_p = jnp.pad(x.astype(f32), ((0, n_pad - n), (0, cp - c))).astype(mxu_dtype)
    w1_t = jnp.pad(params["w1"].T.astype(f32),
                   ((0, cp - c), (0, hp - hdim))).astype(mxu_dtype)
    w2_t = jnp.pad(params["w2"].T.astype(f32),
                   ((0, hp - hdim), (0, cp - c))).astype(mxu_dtype)
    g1 = jnp.pad(params["gamma1"].astype(f32), (0, hp - hdim))
    be1 = jnp.pad(params["beta1"].astype(f32), (0, hp - hdim))
    g2 = jnp.pad(params["gamma2"].astype(f32), (0, cp - c))
    be2 = jnp.pad(params["beta2"].astype(f32), (0, cp - c))

    cparams = pltpu.CompilerParams(
        dimension_semantics=("parallel", "arbitrary"),
        vmem_limit_bytes=_VMEM_LIMIT)

    # ---- pass 1: fc1 + bn1 batch statistics --------------------------------
    h_pre, stats1 = pl.pallas_call(
        functools.partial(_fc1_stats_kernel, n_valid=n, tile_rows=tile,
                          tiles_per_core=tpc, via_mxu=cp > 256),
        grid=(_NSPLIT, tpc),
        in_specs=[pl.BlockSpec((tile, cp), lambda s, i: (s * tpc + i, 0)),
                  pl.BlockSpec((cp, hp), lambda s, i: (0, 0))],
        out_specs=[pl.BlockSpec((tile, hp), lambda s, i: (s * tpc + i, 0)),
                   pl.BlockSpec((1, 2, hp), lambda s, i: (s, 0, 0))],
        out_shape=[jax.ShapeDtypeStruct((n_pad, hp), inter_dtype),
                   jax.ShapeDtypeStruct((_NSPLIT, 2, hp), f32)],
        compiler_params=cparams,
    )(x_p, w1_t)

    aff1 = _bn_affine(stats1, g1, be1, n)

    # ---- pass 2: bn1 apply + relu + fc2 + bn2 batch statistics --------------
    # NOTE: pad rows of o_pre are ReLU(shift1) @ W2 != 0; they are masked out
    # of the statistics and sliced off after pass 3 - never consume them.
    o_pre, stats2 = pl.pallas_call(
        functools.partial(_bn1_fc2_stats_kernel, n_valid=n, tile_rows=tile,
                          tiles_per_core=tpc, via_mxu=hp > 256,
                          mxu_dtype=mxu_dtype),
        grid=(_NSPLIT, tpc),
        in_specs=[pl.BlockSpec((tile, hp), lambda s, i: (s * tpc + i, 0)),
                  pl.BlockSpec((2, hp), lambda s, i: (0, 0)),
                  pl.BlockSpec((hp, cp), lambda s, i: (0, 0))],
        out_specs=[pl.BlockSpec((tile, cp), lambda s, i: (s * tpc + i, 0)),
                   pl.BlockSpec((1, 2, cp), lambda s, i: (s, 0, 0))],
        out_shape=[jax.ShapeDtypeStruct((n_pad, cp), inter_dtype),
                   jax.ShapeDtypeStruct((_NSPLIT, 2, cp), f32)],
        compiler_params=cparams,
    )(h_pre, aff1, w2_t)

    aff2 = _bn_affine(stats2, g2, be2, n)

    # ---- pass 3: bn2 apply + residual + relu (elementwise, fully parallel) --
    # TODO(synk): could alias `out` onto the o_pre HBM buffer via
    # input_output_aliases if the output dtype were made to match inter_dtype.
    out_p = pl.pallas_call(
        _bn2_residual_kernel,
        grid=(num_tiles,),
        in_specs=[pl.BlockSpec((tile, cp), lambda i: (i, 0)),
                  pl.BlockSpec((tile, cp), lambda i: (i, 0)),
                  pl.BlockSpec((2, cp), lambda i: (0, 0))],
        out_specs=pl.BlockSpec((tile, cp), lambda i: (i, 0)),
        out_shape=jax.ShapeDtypeStruct((n_pad, cp), x.dtype),
        compiler_params=pltpu.CompilerParams(
            dimension_semantics=("parallel",),
            vmem_limit_bytes=_VMEM_LIMIT),
    )(o_pre, x_p, aff2)

    return out_p[:n, :c]


# --------------------------------------------------------------------------
# Pure-JAX reference (mirrors the PyTorch module exactly, including biases)
# --------------------------------------------------------------------------
def _reference(x, params):
    h = x @ params["w1"].T + params["b1"]
    m, v = jnp.mean(h, 0), jnp.var(h, 0)
    h = params["gamma1"] * (h - m) / jnp.sqrt(v + EPS) + params["beta1"]
    h = jnp.maximum(h, 0.0)
    o = h @ params["w2"].T + params["b2"]
    m, v = jnp.mean(o, 0), jnp.var(o, 0)
    o = params["gamma2"] * (o - m) / jnp.sqrt(v + EPS) + params["beta2"]
    return jnp.maximum(o + x, 0.0)


if __name__ == "__main__":
    # Small shapes that still exercise multi-tile stat accumulation, the
    # 2-way core-split partial stats, and pad-row masking
    # (N=300, tile=128 -> grid (2, 2), 212 masked pad rows).
    N, INPLANES, HIDDEN = 300, 32, 64

    key = jax.random.PRNGKey(0)
    kx, kw1, kb1, kw2, kb2 = jax.random.split(key, 5)

    x = jax.random.normal(kx, (N, INPLANES), jnp.float32)

    bound1 = 1.0 / jnp.sqrt(INPLANES)
    bound2 = 1.0 / jnp.sqrt(HIDDEN)
    params = {
        "w1": jax.random.uniform(kw1, (HIDDEN, INPLANES), jnp.float32, -bound1, bound1),
        "b1": jax.random.uniform(kb1, (HIDDEN,), jnp.float32, -bound1, bound1),
        "gamma1": jnp.ones((HIDDEN,), jnp.float32),
        "beta1": jnp.zeros((HIDDEN,), jnp.float32),
        "w2": jax.random.uniform(kw2, (INPLANES, HIDDEN), jnp.float32, -bound2, bound2),
        "b2": jax.random.uniform(kb2, (INPLANES,), jnp.float32, -bound2, bound2),
        "gamma2": jnp.ones((INPLANES,), jnp.float32),
        "beta2": jnp.zeros((INPLANES,), jnp.float32),
    }

    ref = _reference(x, params)

    # f32 config: tight numerical validation of the kernel structure.
    out_f32 = block_forward(x, params, tile_n=128,
                            mxu_dtype=jnp.float32, inter_dtype=jnp.float32)
    jax.block_until_ready(out_f32)
    assert out_f32.shape == (N, INPLANES)
    assert jnp.allclose(out_f32, ref, atol=2e-3, rtol=2e-3), \
        float(jnp.max(jnp.abs(out_f32 - ref)))

    # Default performance config: bf16 MXU inputs + bf16 intermediates
    # (looser tolerance vs the f32 reference, per review).
    out_bf16 = block_forward(x, params, tile_n=128)
    jax.block_until_ready(out_bf16)
    assert out_bf16.shape == (N, INPLANES)
    assert jnp.allclose(out_bf16, ref, atol=0.15, rtol=0.05), \
        float(jnp.max(jnp.abs(out_bf16 - ref)))

    print("KERNEL_OK")
</pallas_src>

<mosaic_0001>
module attributes {stable_mosaic.version = 11 : i64} {
  func.func @_fc1_stats_kernel(%arg0: i32, %arg1: i32, %arg2: memref<128x128xf32, #tpu.memory_space<vmem>>, %arg3: memref<128x128xf32, #tpu.memory_space<vmem>>, %arg4: memref<128x128xf32, #tpu.memory_space<vmem>>, %arg5: memref<1x2x128xf32, #tpu.memory_space<vmem>>) attributes {dimension_semantics = [#tpu.dimension_semantics<parallel>, #tpu.dimension_semantics<arbitrary>], iteration_bounds = array<i64: 2, 2>, scalar_prefetch = 0 : i64, scratch_operands = 0 : i64, tpu.core_type = #tpu.core_type<tc>, window_params = [{transform_indices = @transform_0, window_bounds = array<i64: 128, 128>}, {pipeline_mode = #tpu.pipeline_mode<synchronous>, transform_indices = @transform_1, window_bounds = array<i64: 128, 128>}, {transform_indices = @transform_2, window_bounds = array<i64: 128, 128>}, {transform_indices = @transform_3, window_bounds = array<i64: 1, 2, 128>}]} {
    %c2_i32 = arith.constant 2 : i32
    %0 = arith.muli %arg0, %c2_i32 : i32
    %1 = arith.addi %0, %arg1 : i32
    %c0 = arith.constant 0 : index
    %c0_0 = arith.constant 0 : index
    %2 = vector.load %arg2[%c0, %c0_0] : memref<128x128xf32, #tpu.memory_space<vmem>>, vector<128x128xf32>
    %c0_1 = arith.constant 0 : index
    %c0_2 = arith.constant 0 : index
    %3 = vector.load %arg3[%c0_1, %c0_2] : memref<128x128xf32, #tpu.memory_space<vmem>>, vector<128x128xf32>
    %cst = arith.constant dense<0.000000e+00> : vector<128x128xf32>
    %4 = tpu.matmul %2, %3, %cst {dimension_numbers = #tpu.dot_dimension_numbers<[1], [0], [0], [1], [0, 0, 1, 1], [], []>} : vector<128x128xf32>, vector<128x128xf32>, vector<128x128xf32> -> vector<128x128xf32>
    %c0_3 = arith.constant 0 : index
    %c0_4 = arith.constant 0 : index
    %5 = vector.load %arg4[%c0_3, %c0_4] : memref<128x128xf32, #tpu.memory_space<vmem>>, vector<128x128xf32>
    tpu.vector_store %arg4[%c0_3, %c0_4], %4 {strides = array<i32>} : memref<128x128xf32, #tpu.memory_space<vmem>>, vector<128x128xf32>,
    %c0_i32 = arith.constant 0 : i32
    %6 = arith.cmpi eq, %arg1, %c0_i32 : i32
    %7 = arith.extui %6 : i1 to i32
    %c0_i32_5 = arith.constant 0 : i32
    %8 = arith.cmpi ne, %7, %c0_i32_5 : i32
    scf.if %8 {
      %cst_14 = arith.constant 0.000000e+00 : f32
      %29 = vector.broadcast %cst_14 : f32 to vector<1x2x128xf32>
      %c0_15 = arith.constant 0 : index
      %c0_16 = arith.constant 0 : index
      %c0_17 = arith.constant 0 : index
      %30 = vector.load %arg5[%c0_15, %c0_16, %c0_17] : memref<1x2x128xf32, #tpu.memory_space<vmem>>, vector<1x2x128xf32>
      tpu.vector_store %arg5[%c0_15, %c0_16, %c0_17], %29 {strides = array<i32>} : memref<1x2x128xf32, #tpu.memory_space<vmem>>, vector<1x2x128xf32>,
    } else {
    }
    %c128_i32 = arith.constant 128 : i32
    %9 = arith.muli %1, %c128_i32 : i32
    %10 = tpu.iota {dimensions = array<i32: 0>} : vector<128x1xi32>
    %11 = vector.broadcast %9 : i32 to vector<128x1xi32>
    %12 = arith.addi %10, %11 : vector<128x1xi32>
    %c300_i32 = arith.constant 300 : i32
    %13 = vector.broadcast %c300_i32 : i32 to vector<128x1xi32>
    %14 = arith.cmpi slt, %12, %13 : vector<128x1xi32>
    %15 = arith.extui %14 : vector<128x1xi1> to vector<128x1xi32>
    %16 = arith.sitofp %15 : vector<128x1xi32> to vector<128x1xf32>
    %17 = vector.broadcast %16 : vector<128x1xf32> to vector<128x128xf32>
    %18 = arith.mulf %4, %17 : vector<128x128xf32>
    %cst_6 = arith.constant dense<0.000000e+00> : vector<128xf32>
    %19 = vector.multi_reduction <add>, %18, %cst_6 [0] : vector<128x128xf32> to vector<128xf32>
    %20 = vector.shape_cast %19 : vector<128xf32> to vector<1x128xf32>
    %21 = arith.mulf %18, %4 : vector<128x128xf32>
    %cst_7 = arith.constant dense<0.000000e+00> : vector<128xf32>
    %22 = vector.multi_reduction <add>, %21, %cst_7 [0] : vector<128x128xf32> to vector<128xf32>
    %23 = vector.shape_cast %22 : vector<128xf32> to vector<1x128xf32>
    %24 = tpu.concatenate %20, %23 in 0 : vector<1x128xf32>, vector<1x128xf32> -> vector<2x128xf32>
    %c0_8 = arith.constant 0 : index
    %c0_9 = arith.constant 0 : index
    %c0_10 = arith.constant 0 : index
    %25 = vector.load %arg5[%c0_8, %c0_9, %c0_10] : memref<1x2x128xf32, #tpu.memory_space<vmem>>, vector<1x2x128xf32>
    %26 = vector.shape_cast %24 : vector<2x128xf32> to vector<1x2x128xf32>
    %27 = arith.addf %25, %26 : vector<1x2x128xf32>
    %c0_11 = arith.constant 0 : index
    %c0_12 = arith.constant 0 : index
    %c0_13 = arith.constant 0 : index
    %28 = vector.load %arg5[%c0_11, %c0_12, %c0_13] : memref<1x2x128xf32, #tpu.memory_space<vmem>>, vector<1x2x128xf32>
    tpu.vector_store %arg5[%c0_11, %c0_12, %c0_13], %27 {strides = array<i32>} : memref<1x2x128xf32, #tpu.memory_space<vmem>>, vector<1x2x128xf32>,
    return
  }
  func.func @transform_0(%arg0: i32, %arg1: i32) -> (i32, i32) {
    %c2_i32 = arith.constant 2 : i32
    %0 = arith.muli %arg0, %c2_i32 : i32
    %1 = arith.addi %0, %arg1 : i32
    %c0_i32 = arith.constant 0 : i32
    %c0_i32_0 = arith.constant 0 : i32
    return %1, %c0_i32 : i32, i32
  }
  func.func @transform_1(%arg0: i32, %arg1: i32) -> (i32, i32) {
    %c0_i32 = arith.constant 0 : i32
    %c0_i32_0 = arith.constant 0 : i32
    %c0_i32_1 = arith.constant 0 : i32
    return %c0_i32, %c0_i32_0 : i32, i32
  }
  func.func @transform_2(%arg0: i32, %arg1: i32) -> (i32, i32) {
    %c2_i32 = arith.constant 2 : i32
    %0 = arith.muli %arg0, %c2_i32 : i32
    %1 = arith.addi %0, %arg1 : i32
    %c0_i32 = arith.constant 0 : i32
    %c0_i32_0 = arith.constant 0 : i32
    return %1, %c0_i32 : i32, i32
  }
  func.func @transform_3(%arg0: i32, %arg1: i32) -> (i32, i32, i32) {
    %c0_i32 = arith.constant 0 : i32
    %c0_i32_0 = arith.constant 0 : i32
    %c0_i32_1 = arith.constant 0 : i32
    return %arg0, %c0_i32, %c0_i32_0 : i32, i32, i32
  }
}

</mosaic_0001>

<llo_original>
// kernel: tpu_custom_call.1
$region0: #{tpu_custom_call.1}
  #allocation0 [shape = 'u32[]', space=smem, size = 0x4, offset = 0x4, fixed_abs, tag = 'smem constant byte address 0x4 - core index']
  #allocation1 [shape = 'u32[144,128]{1,0:T(1,128)}', space=vmem, size = 0x12000, scoped, tag = 'internal scratch']
  %s0 = inlined_call_operand.hbm [shape: f32[512,128], index: 0, kind: input, shape index: {}]
  %s1 = inlined_call_operand.hbm [shape: f32[128,128], index: 1, kind: input, shape index: {}]
  %s2 = inlined_call_operand.hbm [shape: f32[512,128], index: 2, kind: output, shape index: {0}]
  %s3 = inlined_call_operand.hbm [shape: f32[2,2,128], index: 3, kind: output, shape index: {1}]
  %4 = xla_tuple %s2, %s3
  %s5 = sld [smem:[#allocation0]]
  $region61: #{tpu_custom_call.1} parent=0
    _
  %s7 = ssub.s32 1, %s5
  %s8 = scalar_select 0, %s7, %s5
  $region1: #{tpu_custom_call.1} parent=0
    #allocation2 [shape = 'u8[131072]{0}', space=vmem, size = 0x20000, scoped, tag = 'input window, operand 0']
    #allocation3 [shape = 's32[2]{0}', space=sflag, size = 0x8, scoped, tag = 'scoped memory for tpu_custom_call.1']
    #allocation4 [shape = 's32[2]{0}', space=sflag, size = 0x8, scoped, tag = 'scoped memory for tpu_custom_call.1']
    #allocation5 [shape = 'u8[65536]{0}', space=vmem, size = 0x10000, scoped, tag = 'input window, operand 1, single buffered']
    #allocation6 [shape = 's32[1]{0}', space=sflag, size = 0x4, scoped, tag = 'scoped memory for tpu_custom_call.1']
    #allocation7 [shape = 'u8[131072]{0}', space=vmem, size = 0x20000, scoped, tag = 'output window, operand 0']
    #allocation8 [shape = 'u8[2048]{0}', space=vmem, size = 0x800, scoped, tag = 'output window, operand 1']
    #allocation9 [shape = 's32[2]{0}', space=sflag, size = 0x8, scoped, tag = 'scoped memory for tpu_custom_call.1']
    %9 = vsyncpa [#allocation3], 0
    %s10 = scalar_lea.sflag [#allocation3], 1
    %11 = vsyncpa %s10, 0
    %12 = vsyncpa [#allocation6], 0
    %13 = vsyncpa [#allocation4], 0
    %s14 = scalar_lea.sflag [#allocation4], 1
    %15 = vsyncpa %s14, 0
    %16 = vsyncpa [#allocation9], 0
    %s17 = scalar_lea.sflag [#allocation9], 1
    %18 = vsyncpa %s17, 0
    loop: start=0, step=1, limit=6
    $region2: #{tpu_custom_call.1} parent=1 // loop_pre_header
      _
    $region3: #{tpu_custom_call.1} parent=1 // loop_header
      %s20 = sphi 0, %s24
      %p21 = scmp.ge.s32.totalorder %s20, 6
      %s27 = sphi 0, %s39
      %s28 = sphi 0, %s35
      %s29 = sphi 0, %s27
      %s30 = sphi 0, %s28
      %s31 = sphi 0, %s29
      %s32 = sphi 0, %s30
      %s46 = sphi 0, %s48
      %s49 = sphi 0, %s46
      %s50 = sphi 0, %s49
      %s66 = sphi 0, %s50
      %s70 = sphi 0, %s70
      %s72 = sphi 0, %s70
      %s73 = sphi 0, %s72
      %s87 = sphi 0, %s73
      %s97 = sphi 0, %s99
      %s100 = sphi 0, %s97
      %s101 = sphi 0, %s100
      %s117 = sphi 0, %s101
      %s123 = sphi 0, %s125
      %s126 = sphi 0, %s123
      %s127 = sphi 0, %s126
      %s143 = sphi 0, %s127
    $region4: #{tpu_custom_call.1} parent=1 // loop_header_branch
      %23 = sbr.rel (%p21) target = $region8
    $region5: #{tpu_custom_call.1} parent=1 // loop_body
      %s25 = ssub.s32 %s20, 1
      %s26 = ssub.s32 %s20, 2
      %s33 = sadd.s32 1, %s28
      %p34 = scmp.ge.s32.totalorder %s33, 2
      %s35 = scalar_select %p34, 0, %s33
      %s36 = sadd.s32 1, %s27
      %s37 = scalar_select %p34, %s36, %s27
      %p38 = scmp.ge.s32.totalorder %s37, 2
      %s39 = scalar_select %p38, 0, %s37
      %s40 = smul.u32 %s27, 2
      %s41 = sadd.s32 %s40, %s28
      %s42 = smul.u32 %s39, 2
      %s43 = sadd.s32 %s42, %s35
      %s44 = ssub.s32 %s41, %s43
      %p45 = scmp.eq.s32.totalorder %s44, 0
      %s47 = sadd.s32 %s46, 1
      %s48 = scalar_select %p45, %s46, %s47
      %p51 = pneg %p45
      %p52 = scmp.eq.s32.totalorder %s20, 3
      %p53 = por %p51, %p52
      %p54 = scmp.ne.s32.totalorder %s46, %s49
      %p55 = scmp.eq.s32.totalorder %s20, 0
      %p56 = por %p54, %p55
      %p57 = scmp.ne.s32.totalorder %s46, %s49
      %p58 = scmp.eq.s32.totalorder %s25, 3
      %p59 = por %p57, %p58
      %p60 = scmp.ne.s32.totalorder %s49, %s50
      %p61 = scmp.eq.s32.totalorder %s25, 0
      %p62 = por %p60, %p61
      %p63 = scmp.ne.s32.totalorder %s49, %s50
      %p64 = scmp.eq.s32.totalorder %s26, 3
      %p65 = por %p63, %p64
      %p67 = scmp.ne.s32.totalorder %s50, %s66
      %p68 = scmp.eq.s32.totalorder %s26, 0
      %p69 = por %p67, %p68
      %s71 = sadd.s32 %s70, 1
      %p74 = scmp.eq.s32.totalorder %s20, 3
      %p75 = scmp.ne.s32.totalorder %s70, %s72
      %p76 = scmp.eq.s32.totalorder %s20, 0
      %p77 = por %p75, %p76
      %p78 = scmp.ne.s32.totalorder %s70, %s72
      %p79 = scmp.eq.s32.totalorder %s25, 3
      %p80 = por %p78, %p79
      %p81 = scmp.ne.s32.totalorder %s72, %s73
      %p82 = scmp.eq.s32.totalorder %s25, 0
      %p83 = por %p81, %p82
      %p84 = scmp.ne.s32.totalorder %s72, %s73
      %p85 = scmp.eq.s32.totalorder %s26, 3
      %p86 = por %p84, %p85
      %p88 = scmp.ne.s32.totalorder %s73, %s87
      %p89 = scmp.eq.s32.totalorder %s26, 0
      %p90 = por %p88, %p89
      %s91 = smul.u32 %s27, 2
      %s92 = sadd.s32 %s91, %s28
      %s93 = smul.u32 %s39, 2
      %s94 = sadd.s32 %s93, %s35
      %s95 = ssub.s32 %s92, %s94
      %p96 = scmp.eq.s32.totalorder %s95, 0
      %s98 = sadd.s32 %s97, 1
      %s99 = scalar_select %p96, %s97, %s98
      %p102 = pneg %p96
      %p103 = scmp.eq.s32.totalorder %s20, 3
      %p104 = por %p102, %p103
      %p105 = scmp.ne.s32.totalorder %s97, %s100
      %p106 = scmp.eq.s32.totalorder %s20, 0
      %p107 = por %p105, %p106
      %p108 = scmp.ne.s32.totalorder %s97, %s100
      %p109 = scmp.eq.s32.totalorder %s25, 3
      %p110 = por %p108, %p109
      %p111 = scmp.ne.s32.totalorder %s100, %s101
      %p112 = scmp.eq.s32.totalorder %s25, 0
      %p113 = por %p111, %p112
      %p114 = scmp.ne.s32.totalorder %s100, %s101
      %p115 = scmp.eq.s32.totalorder %s26, 3
      %p116 = por %p114, %p115
      %p118 = scmp.ne.s32.totalorder %s101, %s117
      %p119 = scmp.eq.s32.totalorder %s26, 0
      %p120 = por %p118, %p119
      %s121 = ssub.s32 %s27, %s39
      %p122 = scmp.eq.s32.totalorder %s121, 0
      %s124 = sadd.s32 %s123, 1
      %s125 = scalar_select %p122, %s123, %s124
      %p128 = pneg %p122
      %p129 = scmp.eq.s32.totalorder %s20, 3
      %p130 = por %p128, %p129
      %p131 = scmp.ne.s32.totalorder %s123, %s126
      %p132 = scmp.eq.s32.totalorder %s20, 0
      %p133 = por %p131, %p132
      %p134 = scmp.ne.s32.totalorder %s123, %s126
      %p135 = scmp.eq.s32.totalorder %s25, 3
      %p136 = por %p134, %p135
      %p137 = scmp.ne.s32.totalorder %s126, %s127
      %p138 = scmp.eq.s32.totalorder %s25, 0
      %p139 = por %p137, %p138
      %p140 = scmp.ne.s32.totalorder %s126, %s127
      %p141 = scmp.eq.s32.totalorder %s26, 3
      %p142 = por %p140, %p141
      %p144 = scmp.ne.s32.totalorder %s127, %s143
      %p145 = scmp.eq.s32.totalorder %s26, 0
      %p146 = por %p144, %p145
      %p147 = scmp.le.s32.totalorder 1, %s20
      %p148 = scmp.lt.s32.totalorder %s20, 5
      %p149 = pnand %p147, %p148
      %p150 = pneg %p149
      // Predicated region
      $region9: #{tpu_custom_call.1} parent=5 // pred_check
        _
      $region10: #{tpu_custom_call.1} parent=5 // pred_check_branch
        %152 = sbr.rel (%p149) target = $region12
      $region11: #{tpu_custom_call.1} parent=5 // pred_region
        %s153 = ssub.s32 %s20, 1
        // Predicated region
        $region13: #{tpu_custom_call.1} parent=11 // pred_check
          %p154 = pneg %p83
        $region14: #{tpu_custom_call.1} parent=11 // pred_check_branch
          %156 = sbr.rel (%p154) target = $region16
        $region15: #{tpu_custom_call.1} parent=11 // pred_region
          %s158 = ssub.s32 2048, 2048
          %159 = vsyncadd [#allocation6], %s158
          %s160 = sshll.u32 [#allocation5], 4
          %s161 = int_to_ptr.vmem [resolvable:$true] %s160
          %166 = dma.hbm_to_vmem [thread:$0]  %s1, 2048, %s161, [#allocation6], 128, 128, 8
        $region16: #{tpu_custom_call.1} parent=11 // pred_fallthru
          _
      $region12: #{tpu_custom_call.1} parent=5 // pred_fallthru
        _
      %p167 = scmp.lt.s32.totalorder %s20, 4
      // Predicated region
      $region17: #{tpu_custom_call.1} parent=5 // pred_check
        %p168 = pneg %p167
      $region18: #{tpu_custom_call.1} parent=5 // pred_check_branch
        %170 = sbr.rel (%p168) target = $region20
      $region19: #{tpu_custom_call.1} parent=5 // pred_region
        // Predicated region
        $region21: #{tpu_custom_call.1} parent=19 // pred_check
          %p171 = pneg %p56
        $region22: #{tpu_custom_call.1} parent=19 // pred_check_branch
          %173 = sbr.rel (%p171) target = $region24
        $region23: #{tpu_custom_call.1} parent=19 // pred_region
          %s174 = sand.u32 %s46, 1
          %s175 = scalar_lea.sflag [#allocation3], %s174
          %s176 = sand.u32 %s46, 1
          %s177 = smul.addr %s176, 128
          %s178 = scalar_lea.vmem [#allocation2], %s177
          %s179 = smul.u32 %s27, 2
          %s180 = sadd.s32 %s179, %s28
          %s181 = smul.u32 16, %s180
          %s183 = ssub.s32 2048, 2048
          %184 = vsyncadd %s175, %s183
          %s185 = smul.addr %s181, 128
          %s186 = scalar_lea.hbm %s0, %s185
          %s187 = sshll.u32 %s178, 4
          %s188 = int_to_ptr.vmem [resolvable:$true] %s187
          %193 = dma.hbm_to_vmem [thread:$0]  %s186, 2048, %s188, %s175, 128, 128, 8
        $region24: #{tpu_custom_call.1} parent=19 // pred_fallthru
          _
      $region20: #{tpu_custom_call.1} parent=5 // pred_fallthru
        _
      %p194 = scmp.le.s32.totalorder 1, %s20
      %p195 = scmp.lt.s32.totalorder %s20, 5
      %p196 = pnand %p194, %p195
      %p197 = pneg %p196
      // Predicated region
      $region25: #{tpu_custom_call.1} parent=5 // pred_check
        _
      $region26: #{tpu_custom_call.1} parent=5 // pred_check_branch
        %199 = sbr.rel (%p196) target = $region28
      $region27: #{tpu_custom_call.1} parent=5 // pred_region
        %s200 = ssub.s32 %s20, 1
        %s201 = sand.u32 %s49, 1
        %s202 = scalar_lea.sflag [#allocation3], %s201
        %s203 = sand.u32 %s49, 1
        %s204 = smul.addr %s203, 128
        %s205 = scalar_lea.vmem [#allocation2], %s204
        // Predicated region
        $region29: #{tpu_custom_call.1} parent=27 // pred_check
          %p206 = pneg %p62
        $region30: #{tpu_custom_call.1} parent=27 // pred_check_branch
          %208 = sbr.rel (%p206) target = $region32
        $region31: #{tpu_custom_call.1} parent=27 // pred_region
          %209 = dma.done %s202, 2048
        $region32: #{tpu_custom_call.1} parent=27 // pred_fallthru
          _
        // Predicated region
        $region33: #{tpu_custom_call.1} parent=27 // pred_check
          %p210 = pneg %p83
        $region34: #{tpu_custom_call.1} parent=27 // pred_check_branch
          %212 = sbr.rel (%p210) target = $region36
        $region35: #{tpu_custom_call.1} parent=27 // pred_region
          %213 = dma.done [#allocation6], 2048
        $region36: #{tpu_custom_call.1} parent=27 // pred_fallthru
          _
        %s214 = sand.u32 %s49, 1
        %s215 = scalar_lea.sflag [#allocation3], %s214
        %s216 = sand.u32 %s49, 1
        %s217 = smul.addr %s216, 128
        %s218 = scalar_lea.vmem [#allocation2], %s217
        %p219 = pneg %p62
        %p220 = pneg %p59
        %p221 = pneg %p83
        %p222 = pneg %p80
        %p223 = pneg %p113
        %p224 = pneg %p110
        %s225 = sand.u32 %s100, 1
        %s226 = scalar_lea.sflag [#allocation4], %s225
        %s227 = sand.u32 %s100, 1
        %s228 = smul.addr %s227, 128
        %s229 = scalar_lea.vmem [#allocation7], %s228
        %p230 = pneg %p139
        %p231 = pneg %p136
        %s232 = sand.u32 %s126, 1
        %s233 = scalar_lea.sflag [#allocation9], %s232
        %s234 = sand.u32 %s126, 1
        %s235 = smul.addr %s234, 2
        %s236 = scalar_lea.vmem [#allocation8], %s235
        %s237 = smul.u32 %s29, 2
        %s238 = sadd.s32 %s237, %s30
        %s239 = smul.u32 16, %s238
        %s240 = smul.u32 %s29, 2
        %s241 = sadd.s32 %s240, %s30
        %s242 = smul.u32 16, %s241
        %s243 = smul.u32 %s29, 2
        %s244 = sadd.s32 %s243, %s30
        %v245 = vld [vmem:[%s205] sm:$0xff]
        %v246 = vld [vmem:[%s205 + $0x8] sm:$0xff]
        %v247 = vld [vmem:[%s205 + $0x10] sm:$0xff]
        %v248 = vld [vmem:[%s205 + $0x18] sm:$0xff]
        %v249 = vld [vmem:[%s205 + $0x20] sm:$0xff]
        %v250 = vld [vmem:[%s205 + $0x28] sm:$0xff]
        %v251 = vld [vmem:[%s205 + $0x30] sm:$0xff]
        %v252 = vld [vmem:[%s205 + $0x38] sm:$0xff]
        %v253 = vld [vmem:[%s205 + $0x40] sm:$0xff]
        %v254 = vld [vmem:[%s205 + $0x48] sm:$0xff]
        %v255 = vld [vmem:[%s205 + $0x50] sm:$0xff]
        %v256 = vld [vmem:[%s205 + $0x58] sm:$0xff]
        %v257 = vld [vmem:[%s205 + $0x60] sm:$0xff]
        %v258 = vld [vmem:[%s205 + $0x68] sm:$0xff]
        %v259 = vld [vmem:[%s205 + $0x70] sm:$0xff]
        %v260 = vld [vmem:[%s205 + $0x78] sm:$0xff]
        %v261 = vld [vmem:[#allocation5] sm:$0xff]
        %v262 = vld [vmem:[#allocation5 + $0x8] sm:$0xff]
        %v263 = vld [vmem:[#allocation5 + $0x10] sm:$0xff]
        %v264 = vld [vmem:[#allocation5 + $0x18] sm:$0xff]
        %v265 = vld [vmem:[#allocation5 + $0x20] sm:$0xff]
        %v266 = vld [vmem:[#allocation5 + $0x28] sm:$0xff]
        %v267 = vld [vmem:[#allocation5 + $0x30] sm:$0xff]
        %v268 = vld [vmem:[#allocation5 + $0x38] sm:$0xff]
        %v269 = vld [vmem:[#allocation5 + $0x40] sm:$0xff]
        %v270 = vld [vmem:[#allocation5 + $0x48] sm:$0xff]
        %v271 = vld [vmem:[#allocation5 + $0x50] sm:$0xff]
        %v272 = vld [vmem:[#allocation5 + $0x58] sm:$0xff]
        %v273 = vld [vmem:[#allocation5 + $0x60] sm:$0xff]
        %v274 = vld [vmem:[#allocation5 + $0x68] sm:$0xff]
        %v275 = vld [vmem:[#allocation5 + $0x70] sm:$0xff]
        %v276 = vld [vmem:[#allocation5 + $0x78] sm:$0xff]
        %277 = vmatprep.subr.mxu0 0.0
        %278 = vmatpush1.msra.mxu0 %v276
        %279 = vmatprep.subr.mxu0 0.0
        %280 = vmatpush1.msra.mxu0 %v275
        %281 = vmatprep.subr.mxu0 0.0
        %282 = vmatpush1.msra.mxu0 %v274
        %283 = vmatprep.subr.mxu0 0.0
        %284 = vmatpush1.msra.mxu0 %v273
        %285 = vmatprep.subr.mxu0 0.0
        %286 = vmatpush1.msra.mxu0 %v272
        %287 = vmatprep.subr.mxu0 0.0
        %288 = vmatpush1.msra.mxu0 %v271
        %289 = vmatprep.subr.mxu0 0.0
        %290 = vmatpush1.msra.mxu0 %v270
        %291 = vmatprep.subr.mxu0 0.0
        %292 = vmatpush1.msra.mxu0 %v269
        %293 = vmatprep.subr.mxu0 0.0
        %294 = vmatpush1.msra.mxu0 %v268
        %295 = vmatprep.subr.mxu0 0.0
        %296 = vmatpush1.msra.mxu0 %v267
        %297 = vmatprep.subr.mxu0 0.0
        %298 = vmatpush1.msra.mxu0 %v266
        %299 = vmatprep.subr.mxu0 0.0
        %300 = vmatpush1.msra.mxu0 %v265
        %301 = vmatprep.subr.mxu0 0.0
        %302 = vmatpush1.msra.mxu0 %v264
        %303 = vmatprep.subr.mxu0 0.0
        %304 = vmatpush1.msra.mxu0 %v263
        %305 = vmatprep.subr.mxu0 0.0
        %306 = vmatpush1.msra.mxu0 %v262
        %307 = vmatprep.subr.mxu0 0.0
        %308 = vmatpush1.msra.mxu0 %v261
        %309 = vmatprep.subr.mxu0 0.0
        %310 = vmatpush2.msra.mxu0 0.0
        %311 = vmatprep.subr.mxu0 0.0
        %312 = vmatpush2.msra.mxu0 0.0
        %313 = vmatprep.subr.mxu0 0.0
        %314 = vmatpush2.msra.mxu0 0.0
        %315 = vmatprep.subr.mxu0 0.0
        %316 = vmatpush2.msra.mxu0 0.0
        %317 = vmatprep.subr.mxu0 0.0
        %318 = vmatpush2.msra.mxu0 0.0
        %319 = vmatprep.subr.mxu0 0.0
        %320 = vmatpush2.msra.mxu0 0.0
        %321 = vmatprep.subr.mxu0 0.0
        %322 = vmatpush2.msra.mxu0 0.0
        %323 = vmatprep.subr.mxu0 0.0
        %324 = vmatpush2.msra.mxu0 0.0
        %325 = vmatprep.subr.mxu0 0.0
        %326 = vmatpush2.msra.mxu0 0.0
        %327 = vmatprep.subr.mxu0 0.0
        %328 = vmatpush2.msra.mxu0 0.0
        %329 = vmatprep.subr.mxu0 0.0
        %330 = vmatpush2.msra.mxu0 0.0
        %331 = vmatprep.subr.mxu0 0.0
        %332 = vmatpush2.msra.mxu0 0.0
        %333 = vmatprep.subr.mxu0 0.0
        %334 = vmatpush2.msra.mxu0 0.0
        %335 = vmatprep.subr.mxu0 0.0
        %336 = vmatpush2.msra.mxu0 0.0
        %337 = vmatprep.subr.mxu0 0.0
        %338 = vmatpush2.msra.mxu0 0.0
        %339 = vmatprep.subr.mxu0 0.0
        %340 = vmatpush2.msra.mxu0 0.0
        %341 = vmatprep.mubr.f32.mxu0 0.0
        %342 = vmatmul.mubr.f32.gmra.mxu0 %v245
        %v343 = vpop.f32.mrf.mxu0
        %v344 = vadd.f32 0.0, %v343
        %v345 = vpop.f32.mrf.mxu0
        %346 = vmatprep.mubr.f32.mxu0 0.0
        %347 = vmatmul.mubr.f32.gmra.mxu0 %v246
        %v348 = vpop.f32.mrf.mxu0
        %v349 = vadd.f32 0.0, %v348
        %v350 = vpop.f32.mrf.mxu0
        %351 = vmatprep.mubr.f32.mxu0 0.0
        %352 = vmatmul.mubr.f32.gmra.mxu0 %v247
        %v353 = vpop.f32.mrf.mxu0
        %v354 = vadd.f32 0.0, %v353
        %v355 = vpop.f32.mrf.mxu0
        %356 = vmatprep.mubr.f32.mxu0 0.0
        %357 = vmatmul.mubr.f32.gmra.mxu0 %v248
        %v358 = vpop.f32.mrf.mxu0
        %v359 = vadd.f32 0.0, %v358
        %v360 = vpop.f32.mrf.mxu0
        %361 = vmatprep.mubr.f32.mxu0 0.0
        %362 = vmatmul.mubr.f32.gmra.mxu0 %v249
        %v363 = vpop.f32.mrf.mxu0
        %v364 = vadd.f32 0.0, %v363
        %v365 = vpop.f32.mrf.mxu0
        %366 = vmatprep.mubr.f32.mxu0 0.0
        %367 = vmatmul.mubr.f32.gmra.mxu0 %v250
        %v368 = vpop.f32.mrf.mxu0
        %v369 = vadd.f32 0.0, %v368
        %v370 = vpop.f32.mrf.mxu0
        %371 = vmatprep.mubr.f32.mxu0 0.0
        %372 = vmatmul.mubr.f32.gmra.mxu0 %v251
        %v373 = vpop.f32.mrf.mxu0
        %v374 = vadd.f32 0.0, %v373
        %v375 = vpop.f32.mrf.mxu0
        %376 = vmatprep.mubr.f32.mxu0 0.0
        %377 = vmatmul.mubr.f32.gmra.mxu0 %v252
        %v378 = vpop.f32.mrf.mxu0
        %v379 = vadd.f32 0.0, %v378
        %v380 = vpop.f32.mrf.mxu0
        %381 = vmatprep.mubr.f32.mxu0 0.0
        %382 = vmatmul.mubr.f32.gmra.mxu0 %v253
        %v383 = vpop.f32.mrf.mxu0
        %v384 = vadd.f32 0.0, %v383
        %v385 = vpop.f32.mrf.mxu0
        %386 = vmatprep.mubr.f32.mxu0 0.0
        %387 = vmatmul.mubr.f32.gmra.mxu0 %v254
        %v388 = vpop.f32.mrf.mxu0
        %v389 = vadd.f32 0.0, %v388
        %v390 = vpop.f32.mrf.mxu0
        %391 = vmatprep.mubr.f32.mxu0 0.0
        %392 = vmatmul.mubr.f32.gmra.mxu0 %v255
        %v393 = vpop.f32.mrf.mxu0
        %v394 = vadd.f32 0.0, %v393
        %v395 = vpop.f32.mrf.mxu0
        %396 = vmatprep.mubr.f32.mxu0 0.0
        %397 = vmatmul.mubr.f32.gmra.mxu0 %v256
        %v398 = vpop.f32.mrf.mxu0
        %v399 = vadd.f32 0.0, %v398
        %v400 = vpop.f32.mrf.mxu0
        %401 = vmatprep.mubr.f32.mxu0 0.0
        %402 = vmatmul.mubr.f32.gmra.mxu0 %v257
        %v403 = vpop.f32.mrf.mxu0
        %v404 = vadd.f32 0.0, %v403
        %v405 = vpop.f32.mrf.mxu0
        %406 = vmatprep.mubr.f32.mxu0 0.0
        %407 = vmatmul.mubr.f32.gmra.mxu0 %v258
        %v408 = vpop.f32.mrf.mxu0
        %v409 = vadd.f32 0.0, %v408
        %v410 = vpop.f32.mrf.mxu0
        %411 = vmatprep.mubr.f32.mxu0 0.0
        %412 = vmatmul.mubr.f32.gmra.mxu0 %v259
        %v413 = vpop.f32.mrf.mxu0
        %v414 = vadd.f32 0.0, %v413
        %v415 = vpop.f32.mrf.mxu0
        %416 = vmatprep.mubr.f32.mxu0 0.0
        %417 = vmatmul.mubr.f32.gmra.mxu0 %v260
        %v418 = vpop.f32.mrf.mxu0
        %v419 = vadd.f32 0.0, %v418
        %v420 = vpop.f32.mrf.mxu0
        %421 = vdwg.mxu0
        %422 = vst [vmem:[%s229] sm:$0xff] %v344
        %423 = vst [vmem:[%s229 + $0x8] sm:$0xff] %v349
        %424 = vst [vmem:[%s229 + $0x10] sm:$0xff] %v354
        %425 = vst [vmem:[%s229 + $0x18] sm:$0xff] %v359
        %426 = vst [vmem:[%s229 + $0x20] sm:$0xff] %v364
        %427 = vst [vmem:[%s229 + $0x28] sm:$0xff] %v369
        %428 = vst [vmem:[%s229 + $0x30] sm:$0xff] %v374
        %429 = vst [vmem:[%s229 + $0x38] sm:$0xff] %v379
        %430 = vst [vmem:[%s229 + $0x40] sm:$0xff] %v384
        %431 = vst [vmem:[%s229 + $0x48] sm:$0xff] %v389
        %432 = vst [vmem:[%s229 + $0x50] sm:$0xff] %v394
        %433 = vst [vmem:[%s229 + $0x58] sm:$0xff] %v399
        %434 = vst [vmem:[%s229 + $0x60] sm:$0xff] %v404
        %435 = vst [vmem:[%s229 + $0x68] sm:$0xff] %v409
        %436 = vst [vmem:[%s229 + $0x70] sm:$0xff] %v414
        %437 = vst [vmem:[%s229 + $0x78] sm:$0xff] %v419
        %p438 = scmp.eq.s32.totalorder %s30, 0
        // Predicated region
        $region37: #{tpu_custom_call.1} parent=27 // pred_check
          %p439 = pneg %p438
        $region38: #{tpu_custom_call.1} parent=27 // pred_check_branch
          %441 = sbr.rel (%p439) target = $region40
        $region39: #{tpu_custom_call.1} parent=27 // pred_region
          %442 = vst [vmem:[%s236] sm:$0x3] 0.0
        $region40: #{tpu_custom_call.1} parent=27 // pred_fallthru
          _
        %s443 = smul.u32 %s244, 128
        %v444 = vlaneseq
        %v445 = vshrl.u32 %v444, 7
        %v446 = vadd.s32 %v445, 8
        %v447 = vadd.s32 %v445, 16
        %v448 = vadd.s32 %v445, 24
        %v449 = vadd.s32 %v445, 32
        %v450 = vadd.s32 %v445, 40
        %v451 = vadd.s32 %v445, 48
        %v452 = vadd.s32 %v445, 56
        %v453 = vadd.s32 %v445, 64
        %v454 = vadd.s32 %v445, 72
        %v455 = vadd.s32 %v445, 80
        %v456 = vadd.s32 %v445, 88
        %v457 = vadd.s32 %v445, 96
        %v458 = vadd.s32 %v445, 104
        %v459 = vadd.s32 %v445, 112
        %v460 = vadd.s32 %v445, 120
        %v461 = vstv %s443
        %v462 = vadd.s32 %v445, %v461
        %v463 = vadd.s32 %v446, %v461
        %v464 = vadd.s32 %v447, %v461
        %v465 = vadd.s32 %v448, %v461
        %v466 = vadd.s32 %v449, %v461
        %v467 = vadd.s32 %v450, %v461
        %v468 = vadd.s32 %v451, %v461
        %v469 = vadd.s32 %v452, %v461
        %v470 = vadd.s32 %v453, %v461
        %v471 = vadd.s32 %v454, %v461
        %v472 = vadd.s32 %v455, %v461
        %v473 = vadd.s32 %v456, %v461
        %v474 = vadd.s32 %v457, %v461
        %v475 = vadd.s32 %v458, %v461
        %v476 = vadd.s32 %v459, %v461
        %v477 = vadd.s32 %v460, %v461
        %vm478 = vcmp.lt.s32.totalorder %v462, 300
        %vm479 = vcmp.lt.s32.totalorder %v463, 300
        %vm480 = vcmp.lt.s32.totalorder %v464, 300
        %vm481 = vcmp.lt.s32.totalorder %v465, 300
        %vm482 = vcmp.lt.s32.totalorder %v466, 300
        %vm483 = vcmp.lt.s32.totalorder %v467, 300
        %vm484 = vcmp.lt.s32.totalorder %v468, 300
        %vm485 = vcmp.lt.s32.totalorder %v469, 300
        %vm486 = vcmp.lt.s32.totalorder %v470, 300
        %vm487 = vcmp.lt.s32.totalorder %v471, 300
        %vm488 = vcmp.lt.s32.totalorder %v472, 300
        %vm489 = vcmp.lt.s32.totalorder %v473, 300
        %vm490 = vcmp.lt.s32.totalorder %v474, 300
        %vm491 = vcmp.lt.s32.totalorder %v475, 300
        %vm492 = vcmp.lt.s32.totalorder %v476, 300
        %vm493 = vcmp.lt.s32.totalorder %v477, 300
        %v494 = vsel %vm478, 1, 0
        %v495 = vsel %vm479, 1, 0
        %v496 = vsel %vm480, 1, 0
        %v497 = vsel %vm481, 1, 0
        %v498 = vsel %vm482, 1, 0
        %v499 = vsel %vm483, 1, 0
        %v500 = vsel %vm484, 1, 0
        %v501 = vsel %vm485, 1, 0
        %v502 = vsel %vm486, 1, 0
        %v503 = vsel %vm487, 1, 0
        %v504 = vsel %vm488, 1, 0
        %v505 = vsel %vm489, 1, 0
        %v506 = vsel %vm490, 1, 0
        %v507 = vsel %vm491, 1, 0
        %v508 = vsel %vm492, 1, 0
        %v509 = vsel %vm493, 1, 0
        %v510 = vcvt.s32.f32 %v494
        %v511 = vcvt.s32.f32 %v495
        %v512 = vcvt.s32.f32 %v496
        %v513 = vcvt.s32.f32 %v497
        %v514 = vcvt.s32.f32 %v498
        %v515 = vcvt.s32.f32 %v499
        %v516 = vcvt.s32.f32 %v500
        %v517 = vcvt.s32.f32 %v501
        %v518 = vcvt.s32.f32 %v502
        %v519 = vcvt.s32.f32 %v503
        %v520 = vcvt.s32.f32 %v504
        %v521 = vcvt.s32.f32 %v505
        %v522 = vcvt.s32.f32 %v506
        %v523 = vcvt.s32.f32 %v507
        %v524 = vcvt.s32.f32 %v508
        %v525 = vcvt.s32.f32 %v509
        %v526 = vmul.f32 %v344, %v510
        %v527 = vmul.f32 %v349, %v511
        %v528 = vmul.f32 %v354, %v512
        %v529 = vmul.f32 %v359, %v513
        %v530 = vmul.f32 %v364, %v514
        %v531 = vmul.f32 %v369, %v515
        %v532 = vmul.f32 %v374, %v516
        %v533 = vmul.f32 %v379, %v517
        %v534 = vmul.f32 %v384, %v518
        %v535 = vmul.f32 %v389, %v519
        %v536 = vmul.f32 %v394, %v520
        %v537 = vmul.f32 %v399, %v521
        %v538 = vmul.f32 %v404, %v522
        %v539 = vmul.f32 %v409, %v523
        %v540 = vmul.f32 %v414, %v524
        %v541 = vmul.f32 %v419, %v525
        %v542 = vadd.f32 %v526, %v527
        %v543 = vadd.f32 %v542, %v528
        %v544 = vadd.f32 %v543, %v529
        %v545 = vadd.f32 %v544, %v530
        %v546 = vadd.f32 %v545, %v531
        %v547 = vadd.f32 %v546, %v532
        %v548 = vadd.f32 %v547, %v533
        %v549 = vadd.f32 %v548, %v534
        %v550 = vadd.f32 %v549, %v535
        %v551 = vadd.f32 %v550, %v536
        %v552 = vadd.f32 %v551, %v537
        %v553 = vadd.f32 %v552, %v538
        %v554 = vadd.f32 %v553, %v539
        %v555 = vadd.f32 %v554, %v540
        %v556 = vadd.f32 %v555, %v541
        %v557 = vrot.slane %v556, 4
        %v558 = vadd.f32 %v556, %v557
        %v559 = vrot.slane %v558, 2
        %v560 = vadd.f32 %v558, %v559
        %v561 = vrot.slane %v560, 1
        %v562 = vadd.f32 %v560, %v561
        %v563 = vmul.f32 %v526, %v344
        %v564 = vmul.f32 %v527, %v349
        %v565 = vmul.f32 %v528, %v354
        %v566 = vmul.f32 %v529, %v359
        %v567 = vmul.f32 %v530, %v364
        %v568 = vmul.f32 %v531, %v369
        %v569 = vmul.f32 %v532, %v374
        %v570 = vmul.f32 %v533, %v379
        %v571 = vmul.f32 %v534, %v384
        %v572 = vmul.f32 %v535, %v389
        %v573 = vmul.f32 %v536, %v394
        %v574 = vmul.f32 %v537, %v399
        %v575 = vmul.f32 %v538, %v404
        %v576 = vmul.f32 %v539, %v409
        %v577 = vmul.f32 %v540, %v414
        %v578 = vmul.f32 %v541, %v419
        %v579 = vadd.f32 %v563, %v564
        %v580 = vadd.f32 %v579, %v565
        %v581 = vadd.f32 %v580, %v566
        %v582 = vadd.f32 %v581, %v567
        %v583 = vadd.f32 %v582, %v568
        %v584 = vadd.f32 %v583, %v569
        %v585 = vadd.f32 %v584, %v570
        %v586 = vadd.f32 %v585, %v571
        %v587 = vadd.f32 %v586, %v572
        %v588 = vadd.f32 %v587, %v573
        %v589 = vadd.f32 %v588, %v574
        %v590 = vadd.f32 %v589, %v575
        %v591 = vadd.f32 %v590, %v576
        %v592 = vadd.f32 %v591, %v577
        %v593 = vadd.f32 %v592, %v578
        %v594 = vrot.slane %v593, 4
        %v595 = vadd.f32 %v593, %v594
        %v596 = vrot.slane %v595, 2
        %v597 = vadd.f32 %v595, %v596
        %v598 = vrot.slane %v597, 1
        %v599 = vadd.f32 %v597, %v598
        %vm600 = vcmask 1040384
        %v601 = vsel %vm600, %v562, %v599
        %v602 = vld [vmem:[%s236] sm:$0x3]
        %v603 = vadd.f32 %v602, %v601
        %604 = vst [vmem:[%s236] sm:$0x3] %v603
        %s605 = sand.u32 %s100, 1
        %s606 = scalar_lea.sflag [#allocation4], %s605
        %s607 = sand.u32 %s100, 1
        %s608 = smul.addr %s607, 128
        %s609 = scalar_lea.vmem [#allocation7], %s608
        %s610 = sand.u32 %s126, 1
        %s611 = scalar_lea.sflag [#allocation9], %s610
        %s612 = sand.u32 %s126, 1
        %s613 = smul.addr %s612, 2
        %s614 = scalar_lea.vmem [#allocation8], %s613
        // Predicated region
        $region41: #{tpu_custom_call.1} parent=27 // pred_check
          %p615 = pneg %p110
        $region42: #{tpu_custom_call.1} parent=27 // pred_check_branch
          %617 = sbr.rel (%p615) target = $region44
        $region43: #{tpu_custom_call.1} parent=27 // pred_region
          %s618 = smul.u32 %s29, 2
          %s619 = sadd.s32 %s618, %s30
          %s620 = smul.u32 16, %s619
          %s622 = ssub.s32 2048, 2048
          %623 = vsyncadd %s606, %s622
          %s624 = smul.addr %s620, 128
          %s625 = scalar_lea.hbm %s2, %s624
          %s626 = sshll.u32 %s609, 4
          %s627 = int_to_ptr.vmem [resolvable:$true] %s626
          %632 = dma.vmem_to_hbm [thread:$0]  %s627, 2048, %s625, %s606, 128, 128, 8
        $region44: #{tpu_custom_call.1} parent=27 // pred_fallthru
          _
        // Predicated region
        $region45: #{tpu_custom_call.1} parent=27 // pred_check
          %p633 = pneg %p136
        $region46: #{tpu_custom_call.1} parent=27 // pred_check_branch
          %635 = sbr.rel (%p633) target = $region48
        $region47: #{tpu_custom_call.1} parent=27 // pred_region
          %s637 = ssub.s32 32, 32
          %638 = vsyncadd %s611, %s637
          %s639 = smul.addr %s29, 32
          %s640 = scalar_lea.hbm %s3, %s639
          %s642 = sshll.u32 %s614, 4
          %s643 = int_to_ptr.vmem [resolvable:$true] %s642
          %645 = dma.vmem_to_hbm [thread:$0]  %s643, 32, %s640, %s611
        $region48: #{tpu_custom_call.1} parent=27 // pred_fallthru
          _
      $region28: #{tpu_custom_call.1} parent=5 // pred_fallthru
        _
      %p646 = scmp.le.s32.totalorder 2, %s20
      // Predicated region
      $region49: #{tpu_custom_call.1} parent=5 // pred_check
        %p647 = pneg %p646
      $region50: #{tpu_custom_call.1} parent=5 // pred_check_branch
        %649 = sbr.rel (%p647) target = $region52
      $region51: #{tpu_custom_call.1} parent=5 // pred_region
        %s650 = ssub.s32 %s20, 2
        // Predicated region
        $region53: #{tpu_custom_call.1} parent=51 // pred_check
          %p651 = pneg %p116
        $region54: #{tpu_custom_call.1} parent=51 // pred_check_branch
          %653 = sbr.rel (%p651) target = $region56
        $region55: #{tpu_custom_call.1} parent=51 // pred_region
          %s654 = sand.u32 %s101, 1
          %s655 = scalar_lea.sflag [#allocation4], %s654
          %s656 = sand.u32 %s101, 1
          %s657 = smul.addr %s656, 128
          %s658 = scalar_lea.vmem [#allocation7], %s657
          %659 = dma.done %s655, 2048
        $region56: #{tpu_custom_call.1} parent=51 // pred_fallthru
          _
        // Predicated region
        $region57: #{tpu_custom_call.1} parent=51 // pred_check
          %p660 = pneg %p142
        $region58: #{tpu_custom_call.1} parent=51 // pred_check_branch
          %662 = sbr.rel (%p660) target = $region60
        $region59: #{tpu_custom_call.1} parent=51 // pred_region
          %s663 = sand.u32 %s127, 1
          %s664 = scalar_lea.sflag [#allocation9], %s663
          %s665 = sand.u32 %s127, 1
          %s666 = smul.addr %s665, 2
          %s667 = scalar_lea.vmem [#allocation8], %s666
          %668 = dma.done %s664, 32
        $region60: #{tpu_custom_call.1} parent=51 // pred_fallthru
          _
      $region52: #{tpu_custom_call.1} parent=5 // pred_fallthru
        _
    $region6: #{tpu_custom_call.1} parent=1 // loop_footer
      %s24 = sadd.s32 1, %s20
    $region7: #{tpu_custom_call.1} parent=1 // loop_footer_branch
      %19 = sbr.rel target = $region3
    $region8: #{tpu_custom_call.1} parent=1 // loop_exit
      _
    %669 = vsyncpa [#allocation3], 1
    %s670 = scalar_lea.sflag [#allocation3], 1
    %671 = vsyncpa %s670, 1
    %672 = vsyncpa [#allocation6], 1
    %673 = vsyncpa [#allocation4], 1
    %s674 = scalar_lea.sflag [#allocation4], 1
    %675 = vsyncpa %s674, 1
    %676 = vsyncpa [#allocation9], 1
    %s677 = scalar_lea.sflag [#allocation9], 1
    %678 = vsyncpa %s677, 1

</llo_original>
